<compile_context>
chip_gen: v6e
topology: v6e:2x2x1
jax: 0.10.0
libtpu: 0.0.40
codegen_flags: <defaults>
</compile_context>

<pallas_src>
import functools

import jax
import jax.numpy as jnp
from jax.experimental import pallas as pl
from jax.experimental.pallas import tpu as pltpu

PSNR_DATA_RANGE = 2.0   # colors assumed in [-1, 1] (michelangelo compute_psnr default)
PSNR_EPS = 1e-7

_LANES = 128
_TARGET_ROWS = 512                       # ~512x128 f32 = 256 KiB per block
_TARGET_BLOCK_ELEMS = _TARGET_ROWS * _LANES


def _cdiv(a, b):
    return (a + b - 1) // b


def _round_up(x, m):
    return _cdiv(x, m) * m


def _kl_near_far_color_kernel(
    *refs,
    num_vol, two_n, geo_cols_per_step, n_geo_steps,
    n_color_steps, n_kl_steps, has_posterior,
    batch, color_count,
    near_weight, kl_weight, color_weight, color_criterion,
    total_steps,
):
    if has_posterior:
        (logits_ref, labels_ref, pc_ref, gc_ref,
         mu_ref, logvar_ref, out_ref, acc_ref) = refs
    else:
        logits_ref, labels_ref, pc_ref, gc_ref, out_ref, acc_ref = refs
        mu_ref = logvar_ref = None

    g = pl.program_id(0)

    # ---- init accumulators on the first grid step ---------------------------
    @pl.when(g == 0)
    def _init():
        for i in range(8):
            acc_ref[i] = jnp.float32(0.0)

    # ---- geo: BCE-with-logits partial sums + correct-prediction count -------
    def geo_update():
        x = logits_ref[...].astype(jnp.float32)        # (B, geo_cols_per_step)
        y = labels_ref[...].astype(jnp.float32)
        col = g * geo_cols_per_step + jax.lax.broadcasted_iota(
            jnp.int32, x.shape, 1)
        valid_f = (col < two_n).astype(jnp.float32)    # masks column padding
        vol_f = (col < num_vol).astype(jnp.float32)    # vol subset of valid
        near_f = valid_f - vol_f
        # numerically stable BCEWithLogits: max(x,0) - x*y + log1p(exp(-|x|))
        bce = jnp.maximum(x, 0.0) - x * y + jnp.log1p(jnp.exp(-jnp.abs(x)))
        acc_ref[0] = acc_ref[0] + jnp.sum(bce * vol_f)
        acc_ref[1] = acc_ref[1] + jnp.sum(bce * near_f)
        preds = (x >= 0.0).astype(jnp.float32)
        acc_ref[5] = acc_ref[5] + jnp.sum(
            (preds == y).astype(jnp.float32) * valid_f)

    if n_geo_steps < total_steps:
        pl.when(g < n_geo_steps)(geo_update)
    else:
        geo_update()

    # ---- color: squared / absolute error sums (zero padding contributes 0) --
    def color_update():
        d = pc_ref[...].astype(jnp.float32) - gc_ref[...].astype(jnp.float32)
        acc_ref[2] = acc_ref[2] + jnp.sum(d * d)
        if color_criterion == "l1":
            acc_ref[3] = acc_ref[3] + jnp.sum(jnp.abs(d))

    if n_color_steps < total_steps:
        pl.when(g < n_color_steps)(color_update)
    else:
        color_update()

    # ---- kl: sum(mu^2 + exp(logvar) - 1 - logvar)  (zero padding -> 0) ------
    if has_posterior:
        def kl_update():
            mu = mu_ref[...].astype(jnp.float32)
            lv = logvar_ref[...].astype(jnp.float32)
            acc_ref[4] = acc_ref[4] + jnp.sum(mu * mu + jnp.exp(lv) - 1.0 - lv)

        if n_kl_steps < total_steps:
            pl.when(g < n_kl_steps)(kl_update)
        else:
            kl_update()

    # ---- finalize on the last grid step --------------------------------------
    @pl.when(g == total_steps - 1)
    def _finalize():
        inv_vol = 1.0 / float(max(1, batch * num_vol))
        inv_near = 1.0 / float(max(1, batch * (two_n - num_vol)))
        inv_color = 1.0 / float(max(1, color_count))
        inv_geo = 1.0 / float(max(1, batch * two_n))

        vol_bce = acc_ref[0] * inv_vol
        near_bce = acc_ref[1] * inv_near
        mse = acc_ref[2] * inv_color
        if color_criterion == "mse":
            color = mse
        else:
            color = acc_ref[3] * inv_color
        if has_posterior:
            kl = acc_ref[4] * (0.5 / float(max(1, batch)))
        else:
            kl = jnp.float32(0.0)
        accuracy = acc_ref[5] * inv_geo
        psnr = 10.0 * jnp.log10(
            (PSNR_DATA_RANGE * PSNR_DATA_RANGE) / (mse + PSNR_EPS))
        loss = (vol_bce + near_bce * near_weight + color * color_weight
                + kl * kl_weight)

        out_ref[0] = loss
        out_ref[1] = near_bce
        out_ref[2] = vol_bce
        out_ref[3] = color
        out_ref[4] = kl
        out_ref[5] = psnr
        out_ref[6] = accuracy
        out_ref[7] = jnp.float32(0.0)


def _flatten_lane_dense(x):
    """Flatten to a zero-padded lane-dense [n_steps*rows, 128] f32 slab."""
    flat = x.astype(jnp.float32).reshape(-1)
    rows = max(1, _cdiv(flat.shape[0], _LANES))
    rows_per_step = min(_round_up(rows, 8), _TARGET_ROWS)
    n_steps = _cdiv(rows, rows_per_step)
    total = n_steps * rows_per_step * _LANES
    flat = jnp.pad(flat, (0, total - flat.shape[0]))
    return flat.reshape(n_steps * rows_per_step, _LANES), rows_per_step, n_steps


def kl_near_far_color(
    logits, labels, pred_colors, gt_colors,
    posterior_mean=None, posterior_logvar=None,
    *, near_weight=0.1, kl_weight=1.0, color_weight=1.0,
    color_criterion="mse", num_near_samples=None, split="train",
):
    """JAX/Pallas equivalent of KLNearFarColor.forward. Returns (loss, log_dict)."""
    if color_criterion not in ("mse", "l1"):
        raise ValueError(f"{color_criterion} must be [`mse`, `l1`].")

    batch, two_n = logits.shape
    if num_near_samples is None:
        num_vol = two_n // 2
    else:
        num_vol = two_n - num_near_samples

    has_posterior = (posterior_mean is not None) and (posterior_logvar is not None)

    # ---- geo tensors: keep [B, 2N], tile along the lane-dense column axis ----
    tc_geo = min(_round_up(two_n, _LANES),
                 _round_up(_cdiv(_TARGET_BLOCK_ELEMS, max(1, batch)), _LANES))
    n_geo_steps = _cdiv(two_n, tc_geo)
    padded_cols = n_geo_steps * tc_geo
    logits_p = jnp.pad(logits.astype(jnp.float32),
                       ((0, 0), (0, padded_cols - two_n)))
    labels_p = jnp.pad(labels.astype(jnp.float32),
                       ((0, 0), (0, padded_cols - two_n)))

    # ---- small-last-dim tensors: flatten to lane-dense [rows, 128] slabs -----
    pc2, rc, n_color_steps = _flatten_lane_dense(pred_colors)
    gc2, _, _ = _flatten_lane_dense(gt_colors)

    inputs = [logits_p, labels_p, pc2, gc2]
    geo_spec = pl.BlockSpec(
        (batch, tc_geo), lambda g: (0, jnp.minimum(g, n_geo_steps - 1)))
    color_spec = pl.BlockSpec(
        (rc, _LANES), lambda g: (jnp.minimum(g, n_color_steps - 1), 0))
    in_specs = [geo_spec, geo_spec, color_spec, color_spec]

    n_kl_steps = 0
    if has_posterior:
        mu2, rk, n_kl_steps = _flatten_lane_dense(posterior_mean)
        lv2, _, _ = _flatten_lane_dense(posterior_logvar)
        kl_spec = pl.BlockSpec(
            (rk, _LANES), lambda g: (jnp.minimum(g, n_kl_steps - 1), 0))
        inputs += [mu2, lv2]
        in_specs += [kl_spec, kl_spec]

    total_steps = max(n_geo_steps, n_color_steps, n_kl_steps, 1)

    kernel = functools.partial(
        _kl_near_far_color_kernel,
        num_vol=num_vol, two_n=two_n,
        geo_cols_per_step=tc_geo, n_geo_steps=n_geo_steps,
        n_color_steps=n_color_steps, n_kl_steps=n_kl_steps,
        has_posterior=has_posterior,
        batch=batch, color_count=int(pred_colors.size),
        near_weight=float(near_weight), kl_weight=float(kl_weight),
        color_weight=float(color_weight), color_criterion=color_criterion,
        total_steps=total_steps,
    )

    stats = pl.pallas_call(
        kernel,
        grid=(total_steps,),
        out_shape=jax.ShapeDtypeStruct((8,), jnp.float32),
        in_specs=in_specs,
        out_specs=pl.BlockSpec((8,), lambda g: (0,),
                               memory_space=pltpu.MemorySpace.SMEM),
        scratch_shapes=[pltpu.SMEM((8,), jnp.float32)],
        compiler_params=pltpu.CompilerParams(
            dimension_semantics=("arbitrary",)),
    )(*inputs)

    loss = stats[0]
    log = {
        f"{split}/total_loss": stats[0],
        f"{split}/near": stats[1],
        f"{split}/far": stats[2],
        f"{split}/color": stats[3],
        f"{split}/kl": stats[4],
        f"{split}/psnr": stats[5],
        f"{split}/accuracy": stats[6],
    }
    return loss, log


if __name__ == "__main__":
    key = jax.random.PRNGKey(0)
    k1, k2, k3, k4, k5, k6 = jax.random.split(key, 6)

    B, N, M, L, C = 2, 8, 8, 8, 4
    logits = jax.random.normal(k1, (B, 2 * N), dtype=jnp.float32)
    labels = (jax.random.uniform(k2, (B, 2 * N)) > 0.5).astype(jnp.float32)
    pred_colors = jax.random.uniform(k3, (B, M, 3), minval=-1.0, maxval=1.0)
    gt_colors = jax.random.uniform(k4, (B, M, 3), minval=-1.0, maxval=1.0)
    post_mean = 0.1 * jax.random.normal(k5, (B, L, C), dtype=jnp.float32)
    post_logvar = 0.1 * jax.random.normal(k6, (B, L, C), dtype=jnp.float32)

    loss, log = kl_near_far_color(
        logits, labels, pred_colors, gt_colors, post_mean, post_logvar,
        near_weight=0.1, kl_weight=1.0, color_weight=1.0,
        color_criterion="mse", split="train",
    )
    jax.block_until_ready(loss)
    jax.block_until_ready(log)

    # also exercise the no-posterior (kl == 0) + L1 variant
    loss2, _ = kl_near_far_color(logits, labels, pred_colors, gt_colors,
                                 color_criterion="l1")
    jax.block_until_ready(loss2)

    # pure-JAX reference for a sanity check
    def ref_loss(lg, lb, pc, gc, mu=None, lv=None, *, nw=0.1, kw=1.0, cw=1.0,
                 criterion="mse"):
        nv = lg.shape[1] // 2

        def bce(x, y):
            return jnp.mean(jnp.maximum(x, 0.0) - x * y
                            + jnp.log1p(jnp.exp(-jnp.abs(x))))

        vol = bce(lg[:, :nv], lb[:, :nv])
        near = bce(lg[:, nv:], lb[:, nv:])
        d = pc - gc
        color = jnp.mean(d * d) if criterion == "mse" else jnp.mean(jnp.abs(d))
        kl = 0.0
        if mu is not None:
            kl = 0.5 * jnp.sum(mu * mu + jnp.exp(lv) - 1.0 - lv) / lg.shape[0]
        return vol + near * nw + color * cw + kl * kw

    exp1 = float(ref_loss(logits, labels, pred_colors, gt_colors,
                          post_mean, post_logvar))
    exp2 = float(ref_loss(logits, labels, pred_colors, gt_colors,
                          criterion="l1"))
    assert abs(float(loss) - exp1) < 1e-3 * max(1.0, abs(exp1)), (float(loss), exp1)
    assert abs(float(loss2) - exp2) < 1e-3 * max(1.0, abs(exp2)), (float(loss2), exp2)

    print("KERNEL_OK")
</pallas_src>

<mosaic_0001>
module attributes {stable_mosaic.version = 11 : i64} {
  func.func @_kl_near_far_color_kernel(%arg0: i32, %arg1: memref<2x128xf32, #tpu.memory_space<vmem>>, %arg2: memref<2x128xf32, #tpu.memory_space<vmem>>, %arg3: memref<8x128xf32, #tpu.memory_space<vmem>>, %arg4: memref<8x128xf32, #tpu.memory_space<vmem>>, %arg5: memref<8x128xf32, #tpu.memory_space<vmem>>, %arg6: memref<8x128xf32, #tpu.memory_space<vmem>>, %arg7: memref<8xf32, #tpu.memory_space<smem>>, %arg8: memref<8xf32, #tpu.memory_space<smem>>) attributes {dimension_semantics = [#tpu.dimension_semantics<arbitrary>], iteration_bounds = array<i64: 1>, scalar_prefetch = 0 : i64, scratch_operands = 1 : i64, tpu.core_type = #tpu.core_type<tc>, window_params = [{transform_indices = @transform_0, window_bounds = array<i64: 2, 128>}, {transform_indices = @transform_1, window_bounds = array<i64: 2, 128>}, {transform_indices = @transform_2, window_bounds = array<i64: 8, 128>}, {transform_indices = @transform_3, window_bounds = array<i64: 8, 128>}, {transform_indices = @transform_4, window_bounds = array<i64: 8, 128>}, {transform_indices = @transform_5, window_bounds = array<i64: 8, 128>}, {transform_indices = @transform_6, window_bounds = array<i64: 8>}]} {
    %c0_i32 = arith.constant 0 : i32
    %0 = arith.cmpi eq, %arg0, %c0_i32 : i32
    %1 = arith.extui %0 : i1 to i32
    %c0_i32_0 = arith.constant 0 : i32
    %2 = arith.cmpi ne, %1, %c0_i32_0 : i32
    scf.if %2 {
      %cst_28 = arith.constant 0.000000e+00 : f32
      %c0_29 = arith.constant 0 : index
      %88 = memref.load %arg8[%c0_29] : memref<8xf32, #tpu.memory_space<smem>>
      memref.store %cst_28, %arg8[%c0_29] : memref<8xf32, #tpu.memory_space<smem>>
      %cst_30 = arith.constant 0.000000e+00 : f32
      %c1_31 = arith.constant 1 : index
      %89 = memref.load %arg8[%c1_31] : memref<8xf32, #tpu.memory_space<smem>>
      memref.store %cst_30, %arg8[%c1_31] : memref<8xf32, #tpu.memory_space<smem>>
      %cst_32 = arith.constant 0.000000e+00 : f32
      %c2_33 = arith.constant 2 : index
      %90 = memref.load %arg8[%c2_33] : memref<8xf32, #tpu.memory_space<smem>>
      memref.store %cst_32, %arg8[%c2_33] : memref<8xf32, #tpu.memory_space<smem>>
      %cst_34 = arith.constant 0.000000e+00 : f32
      %c3 = arith.constant 3 : index
      %91 = memref.load %arg8[%c3] : memref<8xf32, #tpu.memory_space<smem>>
      memref.store %cst_34, %arg8[%c3] : memref<8xf32, #tpu.memory_space<smem>>
      %cst_35 = arith.constant 0.000000e+00 : f32
      %c4_36 = arith.constant 4 : index
      %92 = memref.load %arg8[%c4_36] : memref<8xf32, #tpu.memory_space<smem>>
      memref.store %cst_35, %arg8[%c4_36] : memref<8xf32, #tpu.memory_space<smem>>
      %cst_37 = arith.constant 0.000000e+00 : f32
      %c5_38 = arith.constant 5 : index
      %93 = memref.load %arg8[%c5_38] : memref<8xf32, #tpu.memory_space<smem>>
      memref.store %cst_37, %arg8[%c5_38] : memref<8xf32, #tpu.memory_space<smem>>
      %cst_39 = arith.constant 0.000000e+00 : f32
      %c6 = arith.constant 6 : index
      %94 = memref.load %arg8[%c6] : memref<8xf32, #tpu.memory_space<smem>>
      memref.store %cst_39, %arg8[%c6] : memref<8xf32, #tpu.memory_space<smem>>
      %cst_40 = arith.constant 0.000000e+00 : f32
      %c7 = arith.constant 7 : index
      %95 = memref.load %arg8[%c7] : memref<8xf32, #tpu.memory_space<smem>>
      memref.store %cst_40, %arg8[%c7] : memref<8xf32, #tpu.memory_space<smem>>
    } else {
    }
    %c0 = arith.constant 0 : index
    %c0_1 = arith.constant 0 : index
    %3 = vector.load %arg1[%c0, %c0_1] : memref<2x128xf32, #tpu.memory_space<vmem>>, vector<2x128xf32>
    %c0_2 = arith.constant 0 : index
    %c0_3 = arith.constant 0 : index
    %4 = vector.load %arg2[%c0_2, %c0_3] : memref<2x128xf32, #tpu.memory_space<vmem>>, vector<2x128xf32>
    %c128_i32 = arith.constant 128 : i32
    %5 = arith.muli %arg0, %c128_i32 : i32
    %6 = tpu.iota {dimensions = array<i32: 1>} : vector<2x128xi32>
    %7 = vector.broadcast %5 : i32 to vector<2x128xi32>
    %8 = arith.addi %7, %6 : vector<2x128xi32>
    %c16_i32 = arith.constant 16 : i32
    %9 = vector.broadcast %c16_i32 : i32 to vector<2x128xi32>
    %10 = arith.cmpi slt, %8, %9 : vector<2x128xi32>
    %11 = arith.extui %10 : vector<2x128xi1> to vector<2x128xi32>
    %12 = arith.sitofp %11 : vector<2x128xi32> to vector<2x128xf32>
    %c8_i32 = arith.constant 8 : i32
    %13 = vector.broadcast %c8_i32 : i32 to vector<2x128xi32>
    %14 = arith.cmpi slt, %8, %13 : vector<2x128xi32>
    %15 = arith.extui %14 : vector<2x128xi1> to vector<2x128xi32>
    %16 = arith.sitofp %15 : vector<2x128xi32> to vector<2x128xf32>
    %17 = arith.subf %12, %16 : vector<2x128xf32>
    %cst = arith.constant 0.000000e+00 : f32
    %18 = vector.broadcast %cst : f32 to vector<2x128xf32>
    %19 = arith.maximumf %3, %18 : vector<2x128xf32>
    %20 = arith.mulf %3, %4 : vector<2x128xf32>
    %21 = arith.subf %19, %20 : vector<2x128xf32>
    %22 = math.absf %3 : vector<2x128xf32>
    %cst_4 = arith.constant 0.000000e+00 : f32
    %23 = vector.broadcast %cst_4 : f32 to vector<2x128xf32>
    %24 = arith.subf %23, %22 : vector<2x128xf32>
    %25 = math.exp %24 : vector<2x128xf32>
    %26 = math.log1p %25 : vector<2x128xf32>
    %27 = arith.addf %21, %26 : vector<2x128xf32>
    %c0_5 = arith.constant 0 : index
    %28 = memref.load %arg8[%c0_5] : memref<8xf32, #tpu.memory_space<smem>>
    %29 = arith.mulf %27, %16 : vector<2x128xf32>
    %30 = vector.shape_cast %29 : vector<2x128xf32> to vector<1x2x128xf32>
    %cst_6 = arith.constant dense<0.000000e+00> : vector<1xf32>
    %31 = vector.multi_reduction <add>, %30, %cst_6 [1, 2] : vector<1x2x128xf32> to vector<1xf32>
    %32 = vector.shape_cast %31 : vector<1xf32> to vector<1x1x1xf32>
    %33 = vector.extract %32[0, 0, 0] : f32 from vector<1x1x1xf32>
    %34 = arith.addf %28, %33 : f32
    %c0_7 = arith.constant 0 : index
    %35 = memref.load %arg8[%c0_7] : memref<8xf32, #tpu.memory_space<smem>>
    memref.store %34, %arg8[%c0_7] : memref<8xf32, #tpu.memory_space<smem>>
    %c1 = arith.constant 1 : index
    %36 = memref.load %arg8[%c1] : memref<8xf32, #tpu.memory_space<smem>>
    %37 = arith.mulf %27, %17 : vector<2x128xf32>
    %38 = vector.shape_cast %37 : vector<2x128xf32> to vector<1x2x128xf32>
    %cst_8 = arith.constant dense<0.000000e+00> : vector<1xf32>
    %39 = vector.multi_reduction <add>, %38, %cst_8 [1, 2] : vector<1x2x128xf32> to vector<1xf32>
    %40 = vector.shape_cast %39 : vector<1xf32> to vector<1x1x1xf32>
    %41 = vector.extract %40[0, 0, 0] : f32 from vector<1x1x1xf32>
    %42 = arith.addf %36, %41 : f32
    %c1_9 = arith.constant 1 : index
    %43 = memref.load %arg8[%c1_9] : memref<8xf32, #tpu.memory_space<smem>>
    memref.store %42, %arg8[%c1_9] : memref<8xf32, #tpu.memory_space<smem>>
    %cst_10 = arith.constant 0.000000e+00 : f32
    %44 = vector.broadcast %cst_10 : f32 to vector<2x128xf32>
    %45 = arith.cmpf oge, %3, %44 : vector<2x128xf32>
    %46 = arith.extui %45 : vector<2x128xi1> to vector<2x128xi32>
    %47 = arith.sitofp %46 : vector<2x128xi32> to vector<2x128xf32>
    %c5 = arith.constant 5 : index
    %48 = memref.load %arg8[%c5] : memref<8xf32, #tpu.memory_space<smem>>
    %49 = arith.cmpf oeq, %47, %4 : vector<2x128xf32>
    %50 = arith.extui %49 : vector<2x128xi1> to vector<2x128xi32>
    %51 = arith.sitofp %50 : vector<2x128xi32> to vector<2x128xf32>
    %52 = arith.mulf %51, %12 : vector<2x128xf32>
    %53 = vector.shape_cast %52 : vector<2x128xf32> to vector<1x2x128xf32>
    %cst_11 = arith.constant dense<0.000000e+00> : vector<1xf32>
    %54 = vector.multi_reduction <add>, %53, %cst_11 [1, 2] : vector<1x2x128xf32> to vector<1xf32>
    %55 = vector.shape_cast %54 : vector<1xf32> to vector<1x1x1xf32>
    %56 = vector.extract %55[0, 0, 0] : f32 from vector<1x1x1xf32>
    %57 = arith.addf %48, %56 : f32
    %c5_12 = arith.constant 5 : index
    %58 = memref.load %arg8[%c5_12] : memref<8xf32, #tpu.memory_space<smem>>
    memref.store %57, %arg8[%c5_12] : memref<8xf32, #tpu.memory_space<smem>>
    %c0_13 = arith.constant 0 : index
    %c0_14 = arith.constant 0 : index
    %59 = vector.load %arg3[%c0_13, %c0_14] : memref<8x128xf32, #tpu.memory_space<vmem>>, vector<8x128xf32>
    %c0_15 = arith.constant 0 : index
    %c0_16 = arith.constant 0 : index
    %60 = vector.load %arg4[%c0_15, %c0_16] : memref<8x128xf32, #tpu.memory_space<vmem>>, vector<8x128xf32>
    %61 = arith.subf %59, %60 : vector<8x128xf32>
    %c2 = arith.constant 2 : index
    %62 = memref.load %arg8[%c2] : memref<8xf32, #tpu.memory_space<smem>>
    %63 = arith.mulf %61, %61 : vector<8x128xf32>
    %64 = vector.shape_cast %63 : vector<8x128xf32> to vector<1x8x128xf32>
    %cst_17 = arith.constant dense<0.000000e+00> : vector<1xf32>
    %65 = vector.multi_reduction <add>, %64, %cst_17 [1, 2] : vector<1x8x128xf32> to vector<1xf32>
    %66 = vector.shape_cast %65 : vector<1xf32> to vector<1x1x1xf32>
    %67 = vector.extract %66[0, 0, 0] : f32 from vector<1x1x1xf32>
    %68 = arith.addf %62, %67 : f32
    %c2_18 = arith.constant 2 : index
    %69 = memref.load %arg8[%c2_18] : memref<8xf32, #tpu.memory_space<smem>>
    memref.store %68, %arg8[%c2_18] : memref<8xf32, #tpu.memory_space<smem>>
    %c0_19 = arith.constant 0 : index
    %c0_20 = arith.constant 0 : index
    %70 = vector.load %arg5[%c0_19, %c0_20] : memref<8x128xf32, #tpu.memory_space<vmem>>, vector<8x128xf32>
    %c0_21 = arith.constant 0 : index
    %c0_22 = arith.constant 0 : index
    %71 = vector.load %arg6[%c0_21, %c0_22] : memref<8x128xf32, #tpu.memory_space<vmem>>, vector<8x128xf32>
    %c4 = arith.constant 4 : index
    %72 = memref.load %arg8[%c4] : memref<8xf32, #tpu.memory_space<smem>>
    %73 = arith.mulf %70, %70 : vector<8x128xf32>
    %74 = math.exp %71 : vector<8x128xf32>
    %75 = arith.addf %73, %74 : vector<8x128xf32>
    %cst_23 = arith.constant 1.000000e+00 : f32
    %76 = vector.broadcast %cst_23 : f32 to vector<8x128xf32>
    %77 = arith.subf %75, %76 : vector<8x128xf32>
    %78 = arith.subf %77, %71 : vector<8x128xf32>
    %79 = vector.shape_cast %78 : vector<8x128xf32> to vector<1x8x128xf32>
    %cst_24 = arith.constant dense<0.000000e+00> : vector<1xf32>
    %80 = vector.multi_reduction <add>, %79, %cst_24 [1, 2] : vector<1x8x128xf32> to vector<1xf32>
    %81 = vector.shape_cast %80 : vector<1xf32> to vector<1x1x1xf32>
    %82 = vector.extract %81[0, 0, 0] : f32 from vector<1x1x1xf32>
    %83 = arith.addf %72, %82 : f32
    %c4_25 = arith.constant 4 : index
    %84 = memref.load %arg8[%c4_25] : memref<8xf32, #tpu.memory_space<smem>>
    memref.store %83, %arg8[%c4_25] : memref<8xf32, #tpu.memory_space<smem>>
    %c0_i32_26 = arith.constant 0 : i32
    %85 = arith.cmpi eq, %arg0, %c0_i32_26 : i32
    %86 = arith.extui %85 : i1 to i32
    %c0_i32_27 = arith.constant 0 : i32
    %87 = arith.cmpi ne, %86, %c0_i32_27 : i32
    scf.if %87 {
      %c0_28 = arith.constant 0 : index
      %88 = memref.load %arg8[%c0_28] : memref<8xf32, #tpu.memory_space<smem>>
      %cst_29 = arith.constant 6.250000e-02 : f32
      %89 = arith.mulf %88, %cst_29 : f32
      %c1_30 = arith.constant 1 : index
      %90 = memref.load %arg8[%c1_30] : memref<8xf32, #tpu.memory_space<smem>>
      %cst_31 = arith.constant 6.250000e-02 : f32
      %91 = arith.mulf %90, %cst_31 : f32
      %c2_32 = arith.constant 2 : index
      %92 = memref.load %arg8[%c2_32] : memref<8xf32, #tpu.memory_space<smem>>
      %cst_33 = arith.constant 0.020833334 : f32
      %93 = arith.mulf %92, %cst_33 : f32
      %c4_34 = arith.constant 4 : index
      %94 = memref.load %arg8[%c4_34] : memref<8xf32, #tpu.memory_space<smem>>
      %cst_35 = arith.constant 2.500000e-01 : f32
      %95 = arith.mulf %94, %cst_35 : f32
      %c5_36 = arith.constant 5 : index
      %96 = memref.load %arg8[%c5_36] : memref<8xf32, #tpu.memory_space<smem>>
      %cst_37 = arith.constant 3.125000e-02 : f32
      %97 = arith.mulf %96, %cst_37 : f32
      %cst_38 = arith.constant 1.000000e-07 : f32
      %98 = arith.addf %93, %cst_38 : f32
      %cst_39 = arith.constant 4.000000e+00 : f32
      %99 = arith.divf %cst_39, %98 : f32
      %100 = math.log %99 : f32
      %cst_40 = arith.constant 0.434294492 : f32
      %101 = arith.mulf %100, %cst_40 : f32
      %cst_41 = arith.constant 1.000000e+01 : f32
      %102 = arith.mulf %cst_41, %101 : f32
      %cst_42 = arith.constant 1.000000e-01 : f32
      %103 = arith.mulf %91, %cst_42 : f32
      %104 = arith.addf %89, %103 : f32
      %cst_43 = arith.constant 1.000000e+00 : f32
      %105 = arith.mulf %93, %cst_43 : f32
      %106 = arith.addf %104, %105 : f32
      %cst_44 = arith.constant 1.000000e+00 : f32
      %107 = arith.mulf %95, %cst_44 : f32
      %108 = arith.addf %106, %107 : f32
      %c0_45 = arith.constant 0 : index
      %109 = memref.load %arg7[%c0_45] : memref<8xf32, #tpu.memory_space<smem>>
      memref.store %108, %arg7[%c0_45] : memref<8xf32, #tpu.memory_space<smem>>
      %c1_46 = arith.constant 1 : index
      %110 = memref.load %arg7[%c1_46] : memref<8xf32, #tpu.memory_space<smem>>
      memref.store %91, %arg7[%c1_46] : memref<8xf32, #tpu.memory_space<smem>>
      %c2_47 = arith.constant 2 : index
      %111 = memref.load %arg7[%c2_47] : memref<8xf32, #tpu.memory_space<smem>>
      memref.store %89, %arg7[%c2_47] : memref<8xf32, #tpu.memory_space<smem>>
      %c3 = arith.constant 3 : index
      %112 = memref.load %arg7[%c3] : memref<8xf32, #tpu.memory_space<smem>>
      memref.store %93, %arg7[%c3] : memref<8xf32, #tpu.memory_space<smem>>
      %c4_48 = arith.constant 4 : index
      %113 = memref.load %arg7[%c4_48] : memref<8xf32, #tpu.memory_space<smem>>
      memref.store %95, %arg7[%c4_48] : memref<8xf32, #tpu.memory_space<smem>>
      %c5_49 = arith.constant 5 : index
      %114 = memref.load %arg7[%c5_49] : memref<8xf32, #tpu.memory_space<smem>>
      memref.store %102, %arg7[%c5_49] : memref<8xf32, #tpu.memory_space<smem>>
      %c6 = arith.constant 6 : index
      %115 = memref.load %arg7[%c6] : memref<8xf32, #tpu.memory_space<smem>>
      memref.store %97, %arg7[%c6] : memref<8xf32, #tpu.memory_space<smem>>
      %cst_50 = arith.constant 0.000000e+00 : f32
      %c7 = arith.constant 7 : index
      %116 = memref.load %arg7[%c7] : memref<8xf32, #tpu.memory_space<smem>>
      memref.store %cst_50, %arg7[%c7] : memref<8xf32, #tpu.memory_space<smem>>
    } else {
    }
    return
  }
  func.func @transform_0(%arg0: i32) -> (i32, i32) {
    %c0_i32 = arith.constant 0 : i32
    %0 = arith.minsi %arg0, %c0_i32 : i32
    %c0_i32_0 = arith.constant 0 : i32
    %c0_i32_1 = arith.constant 0 : i32
    return %c0_i32_0, %0 : i32, i32
  }
  func.func @transform_1(%arg0: i32) -> (i32, i32) {
    %c0_i32 = arith.constant 0 : i32
    %0 = arith.minsi %arg0, %c0_i32 : i32
    %c0_i32_0 = arith.constant 0 : i32
    %c0_i32_1 = arith.constant 0 : i32
    return %c0_i32_0, %0 : i32, i32
  }
  func.func @transform_2(%arg0: i32) -> (i32, i32) {
    %c0_i32 = arith.constant 0 : i32
    %0 = arith.minsi %arg0, %c0_i32 : i32
    %c0_i32_0 = arith.constant 0 : i32
    %c0_i32_1 = arith.constant 0 : i32
    return %0, %c0_i32_0 : i32, i32
  }
  func.func @transform_3(%arg0: i32) -> (i32, i32) {
    %c0_i32 = arith.constant 0 : i32
    %0 = arith.minsi %arg0, %c0_i32 : i32
    %c0_i32_0 = arith.constant 0 : i32
    %c0_i32_1 = arith.constant 0 : i32
    return %0, %c0_i32_0 : i32, i32
  }
  func.func @transform_4(%arg0: i32) -> (i32, i32) {
    %c0_i32 = arith.constant 0 : i32
    %0 = arith.minsi %arg0, %c0_i32 : i32
    %c0_i32_0 = arith.constant 0 : i32
    %c0_i32_1 = arith.constant 0 : i32
    return %0, %c0_i32_0 : i32, i32
  }
  func.func @transform_5(%arg0: i32) -> (i32, i32) {
    %c0_i32 = arith.constant 0 : i32
    %0 = arith.minsi %arg0, %c0_i32 : i32
    %c0_i32_0 = arith.constant 0 : i32
    %c0_i32_1 = arith.constant 0 : i32
    return %0, %c0_i32_0 : i32, i32
  }
  func.func @transform_6(%arg0: i32) -> i32 {
    %c0_i32 = arith.constant 0 : i32
    %c0_i32_0 = arith.constant 0 : i32
    return %c0_i32 : i32
  }
}

</mosaic_0001>

<llo_original>
// kernel: tpu_custom_call.1
$region0: #{tpu_custom_call.1}
  #allocation0 [shape = 'u32[]', space=smem, size = 0x4, offset = 0x4, fixed_abs, tag = 'smem constant byte address 0x4 - core index']
  #allocation1 [shape = 'u32[144,128]{1,0:T(1,128)}', space=vmem, size = 0x12000, scoped, tag = 'internal scratch']
  #allocation2 [shape = 'f32[8]{0:T(128)}', space=smem, size = 0x200, scoped, tag = 'scratch operand']
  %s0 = inlined_call_operand.hbm [shape: f32[2,128], index: 0, kind: input, shape index: {}]
  %s1 = inlined_call_operand.hbm [shape: f32[2,128], index: 1, kind: input, shape index: {}]
  %s2 = inlined_call_operand.hbm [shape: f32[8,128], index: 2, kind: input, shape index: {}]
  %s3 = inlined_call_operand.hbm [shape: f32[8,128], index: 3, kind: input, shape index: {}]
  %s4 = inlined_call_operand.hbm [shape: f32[8,128], index: 4, kind: input, shape index: {}]
  %s5 = inlined_call_operand.vmem [shape: f32[8,128], index: 5, kind: input, shape index: {}]
  %s6 = inlined_call_operand.hbm [shape: f32[8], index: 6, kind: output, shape index: {}]
  %s7 = sld [smem:[#allocation0]]
  $region62: #{tpu_custom_call.1} parent=0
    _
  %s9 = ssub.s32 1, %s7
  %s10 = scalar_select 0, %s9, %s7
  $region1: #{tpu_custom_call.1} parent=0
    #allocation3 [shape = 'u8[1024]{0}', space=vmem, size = 0x400, scoped, tag = 'input window, operand 0, single buffered']
    #allocation4 [shape = 's32[1]{0}', space=sflag, size = 0x4, scoped, tag = 'scoped memory for tpu_custom_call.1']
    #allocation5 [shape = 's32[1]{0}', space=sflag, size = 0x4, scoped, tag = 'scoped memory for tpu_custom_call.1']
    #allocation6 [shape = 'u8[1024]{0}', space=vmem, size = 0x400, scoped, tag = 'input window, operand 1, single buffered']
    #allocation7 [shape = 's32[1]{0}', space=sflag, size = 0x4, scoped, tag = 'scoped memory for tpu_custom_call.1']
    #allocation8 [shape = 'u8[4096]{0}', space=vmem, size = 0x1000, scoped, tag = 'input window, operand 2, single buffered']
    #allocation9 [shape = 'u8[4096]{0}', space=vmem, size = 0x1000, scoped, tag = 'input window, operand 3, single buffered']
    #allocation10 [shape = 's32[1]{0}', space=sflag, size = 0x4, scoped, tag = 'scoped memory for tpu_custom_call.1']
    #allocation11 [shape = 'u8[4096]{0}', space=vmem, size = 0x1000, scoped, tag = 'input window, operand 4, single buffered']
    #allocation12 [shape = 'u8[512]{0}', space=smem, size = 0x200, scoped, tag = 'output window, operand 0, single buffered']
    %11 = vsyncpa [#allocation4], 0
    %12 = vsyncpa [#allocation7], 0
    %13 = vsyncpa [#allocation10], 0
    %14 = vsyncpa [#allocation5], 0
    // Predicated region
    $region2: #{tpu_custom_call.1} parent=1 // pred_check
      _
    $region3: #{tpu_custom_call.1} parent=1 // pred_check_branch
      %16 = sbr.rel (0) target = $region5
    $region4: #{tpu_custom_call.1} parent=1 // pred_region
      %s18 = ssub.s32 32, 32
      %19 = vsyncadd [#allocation4], %s18
      %s21 = sshll.u32 [#allocation3], 4
      %s22 = int_to_ptr.vmem [resolvable:$true] %s21
      %24 = dma.hbm_to_vmem [thread:$0]  %s0, 32, %s22, [#allocation4]
    $region5: #{tpu_custom_call.1} parent=1 // pred_fallthru
      _
    // Predicated region
    $region6: #{tpu_custom_call.1} parent=1 // pred_check
      _
    $region7: #{tpu_custom_call.1} parent=1 // pred_check_branch
      %26 = sbr.rel (0) target = $region9
    $region8: #{tpu_custom_call.1} parent=1 // pred_region
      %s28 = ssub.s32 32, 32
      %29 = vsyncadd [#allocation7], %s28
      %s31 = sshll.u32 [#allocation6], 4
      %s32 = int_to_ptr.vmem [resolvable:$true] %s31
      %34 = dma.hbm_to_vmem [thread:$0]  %s1, 32, %s32, [#allocation7]
    $region9: #{tpu_custom_call.1} parent=1 // pred_fallthru
      _
    // Predicated region
    $region10: #{tpu_custom_call.1} parent=1 // pred_check
      _
    $region11: #{tpu_custom_call.1} parent=1 // pred_check_branch
      %36 = sbr.rel (0) target = $region13
    $region12: #{tpu_custom_call.1} parent=1 // pred_region
      %s38 = ssub.s32 128, 128
      %39 = vsyncadd [#allocation7], %s38
      %s41 = sshll.u32 [#allocation8], 4
      %s42 = int_to_ptr.vmem [resolvable:$true] %s41
      %44 = dma.hbm_to_vmem [thread:$0]  %s2, 128, %s42, [#allocation7]
    $region13: #{tpu_custom_call.1} parent=1 // pred_fallthru
      _
    // Predicated region
    $region14: #{tpu_custom_call.1} parent=1 // pred_check
      _
    $region15: #{tpu_custom_call.1} parent=1 // pred_check_branch
      %46 = sbr.rel (0) target = $region17
    $region16: #{tpu_custom_call.1} parent=1 // pred_region
      %s48 = ssub.s32 128, 128
      %49 = vsyncadd [#allocation10], %s48
      %s51 = sshll.u32 [#allocation9], 4
      %s52 = int_to_ptr.vmem [resolvable:$true] %s51
      %54 = dma.hbm_to_vmem [thread:$0]  %s3, 128, %s52, [#allocation10]
    $region17: #{tpu_custom_call.1} parent=1 // pred_fallthru
      _
    // Predicated region
    $region18: #{tpu_custom_call.1} parent=1 // pred_check
      _
    $region19: #{tpu_custom_call.1} parent=1 // pred_check_branch
      %56 = sbr.rel (0) target = $region21
    $region20: #{tpu_custom_call.1} parent=1 // pred_region
      %s58 = ssub.s32 128, 128
      %59 = vsyncadd [#allocation10], %s58
      %s61 = sshll.u32 [#allocation11], 4
      %s62 = int_to_ptr.vmem [resolvable:$true] %s61
      %64 = dma.hbm_to_vmem [thread:$0]  %s4, 128, %s62, [#allocation10]
    $region21: #{tpu_custom_call.1} parent=1 // pred_fallthru
      _
    // Predicated region
    $region22: #{tpu_custom_call.1} parent=1 // pred_check
      _
    $region23: #{tpu_custom_call.1} parent=1 // pred_check_branch
      %66 = sbr.rel (0) target = $region25
    $region24: #{tpu_custom_call.1} parent=1 // pred_region
      _
    $region25: #{tpu_custom_call.1} parent=1 // pred_fallthru
      _
    // Predicated region
    $region26: #{tpu_custom_call.1} parent=1 // pred_check
      _
    $region27: #{tpu_custom_call.1} parent=1 // pred_check_branch
      %68 = sbr.rel (0) target = $region29
    $region28: #{tpu_custom_call.1} parent=1 // pred_region
      %69 = dma.done [#allocation4], 32
    $region29: #{tpu_custom_call.1} parent=1 // pred_fallthru
      _
    // Predicated region
    $region30: #{tpu_custom_call.1} parent=1 // pred_check
      _
    $region31: #{tpu_custom_call.1} parent=1 // pred_check_branch
      %71 = sbr.rel (0) target = $region33
    $region32: #{tpu_custom_call.1} parent=1 // pred_region
      %72 = dma.done [#allocation7], 32
    $region33: #{tpu_custom_call.1} parent=1 // pred_fallthru
      _
    // Predicated region
    $region34: #{tpu_custom_call.1} parent=1 // pred_check
      _
    $region35: #{tpu_custom_call.1} parent=1 // pred_check_branch
      %74 = sbr.rel (0) target = $region37
    $region36: #{tpu_custom_call.1} parent=1 // pred_region
      %75 = dma.done [#allocation7], 128
    $region37: #{tpu_custom_call.1} parent=1 // pred_fallthru
      _
    // Predicated region
    $region38: #{tpu_custom_call.1} parent=1 // pred_check
      _
    $region39: #{tpu_custom_call.1} parent=1 // pred_check_branch
      %77 = sbr.rel (0) target = $region41
    $region40: #{tpu_custom_call.1} parent=1 // pred_region
      %78 = dma.done [#allocation10], 128
    $region41: #{tpu_custom_call.1} parent=1 // pred_fallthru
      _
    // Predicated region
    $region42: #{tpu_custom_call.1} parent=1 // pred_check
      _
    $region43: #{tpu_custom_call.1} parent=1 // pred_check_branch
      %80 = sbr.rel (0) target = $region45
    $region44: #{tpu_custom_call.1} parent=1 // pred_region
      %81 = dma.done [#allocation10], 128
    $region45: #{tpu_custom_call.1} parent=1 // pred_fallthru
      _
    %p82 = scmp.eq.s32.totalorder 0, 0
    // Predicated region
    $region46: #{tpu_custom_call.1} parent=1 // pred_check
      %p83 = pneg %p82
    $region47: #{tpu_custom_call.1} parent=1 // pred_check_branch
      %85 = sbr.rel (%p83) target = $region49
    $region48: #{tpu_custom_call.1} parent=1 // pred_region
      %s86 = scalar_lea.smem [#allocation2], 0
      %87 = sst [smem:[%s86]] 0.0
      %s88 = scalar_lea.smem [#allocation2], 1
      %89 = sst [smem:[%s88]] 0.0
      %s90 = scalar_lea.smem [#allocation2], 2
      %91 = sst [smem:[%s90]] 0.0
      %s92 = scalar_lea.smem [#allocation2], 3
      %93 = sst [smem:[%s92]] 0.0
      %s94 = scalar_lea.smem [#allocation2], 4
      %95 = sst [smem:[%s94]] 0.0
      %s96 = scalar_lea.smem [#allocation2], 5
      %97 = sst [smem:[%s96]] 0.0
      %s98 = scalar_lea.smem [#allocation2], 6
      %99 = sst [smem:[%s98]] 0.0
      %s100 = scalar_lea.smem [#allocation2], 7
      %101 = sst [smem:[%s100]] 0.0
    $region49: #{tpu_custom_call.1} parent=1 // pred_fallthru
      _
    %v102 = vld [vmem:[#allocation3] sm:$0x3]
    %v103 = vld [vmem:[#allocation6] sm:$0x3]
    %s104 = smul.u32 0, 128
    %v105 = vlaneseq
    %v106 = vand.u32 %v105, 127
    %v107 = vstv %s104
    %v108 = vadd.s32 %v107, %v106
    %vm109 = vcmp.lt.s32.totalorder %v108, 16
    %v110 = vsel %vm109, 1, 0
    %v111 = vcvt.s32.f32 %v110
    %vm112 = vcmp.lt.s32.totalorder %v108, 8
    %v113 = vsel %vm112, 1, 0
    %v114 = vcvt.s32.f32 %v113
    %v115 = vsub.f32 %v111, %v114
    %v116 = vmax.f32 %v102, 0.0
    %v117 = vmul.f32 %v102, %v103
    %v118 = vsub.f32 %v116, %v117
    %v119 = vand.u32 2147483647, %v102
    %v120 = vsub.f32 0.0, %v119
    %v121 = vmul.f32 %v120, 1.442695
    %v122 = vpow.pop %v121
    %v123 = vadd.f32 %v122, 1.0
    %v124 = vlog2.pop %v123
    %v125 = vmul.f32 %v124, 0.6931472
    %v126 = vmul.f32 -0.5, %v122
    %v127 = vadd.f32 %v126, 1.0
    %v128 = vmul.f32 %v127, %v122
    %v129 = vand.u32 2147483647, %v122
    %vm130 = vcmp.lt.f32.partialorder %v129, 0.0004427343
    %v131 = vsel %vm130, %v128, %v125
    %v132 = vadd.f32 %v118, %v131
    %s133 = sld [smem:[#allocation2]]
    %v134 = vmul.f32 %v132, %v114
    %vm135 = vcmask 1041408
    %v136 = vsel %vm135, %v134, 0.0
    %137 = vadd.xlane.f32.xlu0 %v136
    %v138 = vpop.xlane.xlu0 %137
    %v139 = vrot.slane %v138, 4
    %v140 = vadd.f32 %v138, %v139
    %v141 = vrot.slane %v140, 2
    %v142 = vadd.f32 %v140, %v141
    %v143 = vrot.slane %v142, 1
    %v144 = vadd.f32 %v142, %v143
    %s145 = vtos %v144
    %s146 = sadd.f32 %s133, %s145
    %s147 = scalar_lea.smem [#allocation2], 0
    %148 = sst [smem:[%s147]] %s146
    %s149 = sld [smem:[#allocation2 + $0x1]]
    %v150 = vmul.f32 %v132, %v115
    %v151 = vsel %vm135, %v150, 0.0
    %152 = vadd.xlane.f32.xlu0 %v151
    %v153 = vpop.xlane.xlu0 %152
    %v154 = vrot.slane %v153, 4
    %v155 = vadd.f32 %v153, %v154
    %v156 = vrot.slane %v155, 2
    %v157 = vadd.f32 %v155, %v156
    %v158 = vrot.slane %v157, 1
    %v159 = vadd.f32 %v157, %v158
    %s160 = vtos %v159
    %s161 = sadd.f32 %s149, %s160
    %s162 = scalar_lea.smem [#allocation2], 1
    %163 = sst [smem:[%s162]] %s161
    %vm164 = vcmp.ge.f32.partialorder %v102, 0.0
    %v165 = vsel %vm164, 1, 0
    %v166 = vcvt.s32.f32 %v165
    %s167 = sld [smem:[#allocation2 + $0x5]]
    %vm168 = vcmp.eq.f32.partialorder %v166, %v103
    %v169 = vsel %vm168, 1, 0
    %v170 = vcvt.s32.f32 %v169
    %v171 = vmul.f32 %v170, %v111
    %v172 = vsel %vm135, %v171, 0.0
    %173 = vadd.xlane.f32.xlu0 %v172
    %v174 = vpop.xlane.xlu0 %173
    %v175 = vrot.slane %v174, 4
    %v176 = vadd.f32 %v174, %v175
    %v177 = vrot.slane %v176, 2
    %v178 = vadd.f32 %v176, %v177
    %v179 = vrot.slane %v178, 1
    %v180 = vadd.f32 %v178, %v179
    %s181 = vtos %v180
    %s182 = sadd.f32 %s167, %s181
    %s183 = scalar_lea.smem [#allocation2], 5
    %184 = sst [smem:[%s183]] %s182
    %v185 = vld [vmem:[#allocation8] sm:$0xff]
    %v186 = vld [vmem:[#allocation9] sm:$0xff]
    %v187 = vsub.f32 %v185, %v186
    %s188 = sld [smem:[#allocation2 + $0x2]]
    %v189 = vmul.f32 %v187, %v187
    %190 = vadd.xlane.f32.xlu0 %v189
    %v191 = vpop.xlane.xlu0 %190
    %v192 = vrot.slane %v191, 4
    %v193 = vadd.f32 %v191, %v192
    %v194 = vrot.slane %v193, 2
    %v195 = vadd.f32 %v193, %v194
    %v196 = vrot.slane %v195, 1
    %v197 = vadd.f32 %v195, %v196
    %s198 = vtos %v197
    %s199 = sadd.f32 %s188, %s198
    %s200 = scalar_lea.smem [#allocation2], 2
    %201 = sst [smem:[%s200]] %s199
    %v202 = vld [vmem:[#allocation11] sm:$0xff]
    %v203 = vld [vmem:[%s5] sm:$0xff]
    %s204 = sld [smem:[#allocation2 + $0x4]]
    %v205 = vmul.f32 %v202, %v202
    %v206 = vmul.f32 %v203, 1.442695
    %v207 = vpow.pop %v206
    %v208 = vadd.f32 %v205, %v207
    %v209 = vsub.f32 %v208, 1.0
    %v210 = vsub.f32 %v209, %v203
    %211 = vadd.xlane.f32.xlu0 %v210
    %v212 = vpop.xlane.xlu0 %211
    %v213 = vrot.slane %v212, 4
    %v214 = vadd.f32 %v212, %v213
    %v215 = vrot.slane %v214, 2
    %v216 = vadd.f32 %v214, %v215
    %v217 = vrot.slane %v216, 1
    %v218 = vadd.f32 %v216, %v217
    %s219 = vtos %v218
    %s220 = sadd.f32 %s204, %s219
    %s221 = scalar_lea.smem [#allocation2], 4
    %222 = sst [smem:[%s221]] %s220
    // Predicated region
    $region50: #{tpu_custom_call.1} parent=1 // pred_check
      %p223 = pneg %p82
    $region51: #{tpu_custom_call.1} parent=1 // pred_check_branch
      %225 = sbr.rel (%p223) target = $region53
    $region52: #{tpu_custom_call.1} parent=1 // pred_region
      %s226 = sld [smem:[#allocation2]]
      %s227 = smul.f32 %s226, 0.0625
      %s228 = sld [smem:[#allocation2 + $0x1]]
      %s229 = smul.f32 %s228, 0.0625
      %s230 = sld [smem:[#allocation2 + $0x2]]
      %s231 = smul.f32 %s230, 0.020833334
      %s232 = sld [smem:[#allocation2 + $0x4]]
      %s233 = smul.f32 %s232, 0.25
      %s234 = sld [smem:[#allocation2 + $0x5]]
      %s235 = smul.f32 %s234, 0.03125
      %s236 = sadd.f32 %s231, 1e-07
      %v237 = vstv %s236
      %v238 = vrcp.pop %v237
      %s239 = vtos %v238
      %s240 = smul.f32 4.0, %s239
      %v241 = vstv %s240
      %v242 = vlog2.pop %v241
      %v243 = vmul.f32 %v242, 0.6931472
      %s244 = vtos %v243
      %s245 = smul.f32 %s244, 0.4342945
      %s246 = smul.f32 %s245, 10.0
      %s247 = smul.f32 %s229, 0.1
      %s248 = sadd.f32 %s227, %s247
      %s249 = sadd.f32 %s248, %s231
      %s250 = sadd.f32 %s249, %s233
      %s251 = scalar_lea.smem [#allocation12], 0
      %252 = sst [smem:[%s251]] %s250
      %s253 = scalar_lea.smem [#allocation12], 1
      %254 = sst [smem:[%s253]] %s229
      %s255 = scalar_lea.smem [#allocation12], 2
      %256 = sst [smem:[%s255]] %s227
      %s257 = scalar_lea.smem [#allocation12], 3
      %258 = sst [smem:[%s257]] %s231
      %s259 = scalar_lea.smem [#allocation12], 4
      %260 = sst [smem:[%s259]] %s233
      %s261 = scalar_lea.smem [#allocation12], 5
      %262 = sst [smem:[%s261]] %s246
      %s263 = scalar_lea.smem [#allocation12], 6
      %264 = sst [smem:[%s263]] %s235
      %s265 = scalar_lea.smem [#allocation12], 7
      %266 = sst [smem:[%s265]] 0.0
    $region53: #{tpu_custom_call.1} parent=1 // pred_fallthru
      _
    // Predicated region
    $region54: #{tpu_custom_call.1} parent=1 // pred_check
      _
    $region55: #{tpu_custom_call.1} parent=1 // pred_check_branch
      %268 = sbr.rel (0) target = $region57
    $region56: #{tpu_custom_call.1} parent=1 // pred_region
      %s270 = ssub.s32 16, 16
      %271 = vsyncadd [#allocation5], %s270
      %274 = dma.smem_to_hbm [#allocation12], 16, %s6, [#allocation5]
    $region57: #{tpu_custom_call.1} parent=1 // pred_fallthru
      _
    // Predicated region
    $region58: #{tpu_custom_call.1} parent=1 // pred_check
      _
    $region59: #{tpu_custom_call.1} parent=1 // pred_check_branch
      %276 = sbr.rel (0) target = $region61
    $region60: #{tpu_custom_call.1} parent=1 // pred_region
      %277 = dma.done [#allocation5], 16
    $region61: #{tpu_custom_call.1} parent=1 // pred_fallthru
      _
    %278 = sfence
    %279 = vsyncpa [#allocation4], 1
    %280 = vsyncpa [#allocation7], 1
    %281 = vsyncpa [#allocation10], 1
    %282 = vsyncpa [#allocation5], 1

</llo_original>
